<compile_context>
chip_gen: v7x
topology: tpu7x:2x2x1
jax: 0.10.0
libtpu: 0.0.40
codegen_flags: <defaults>
</compile_context>

<pallas_src>
import functools

import jax
import jax.numpy as jnp
from jax import lax
from jax.experimental import pallas as pl
from jax.experimental.pallas import tpu as pltpu


def _cnn_block_kernel(p_ref, w_ref, shift_ref, o_ref, acc_ref, *, apply_act):
    # p_ref:     (1, TM, TK)   bf16 im2col patches for one (batch, row-tile, k-tile)
    # w_ref:     (TK, TN)      bf16 weights (BN scale pre-folded)
    # shift_ref: (1, TN)       f32 folded BN shift (beta - mean*scale), or conv bias
    # o_ref:     (1, TM, TN)   bf16 output tile (lane-dense: TN % 128 == 0)
    # acc_ref:   (TM, TN)      f32 accumulator, lives across the innermost K grid axis
    k = pl.program_id(3)

    @pl.when(k == 0)
    def _():
        acc_ref[...] = jnp.zeros_like(acc_ref)

    acc_ref[...] += jnp.dot(p_ref[0], w_ref[...], preferred_element_type=jnp.float32)

    @pl.when(k == pl.num_programs(3) - 1)
    def _():
        y = acc_ref[...] + shift_ref[...]
        if apply_act:
            y = jnp.maximum(y, 0.1 * y)          # LeakyReLU(0.1): single vmax
        o_ref[0] = y.astype(o_ref.dtype)


def _round_up(x, m):
    return ((x + m - 1) // m) * m


@functools.partial(
    jax.jit, static_argnames=("use_batch_norm", "stride", "padding", "compute_dtype"))
def cnn_block_forward(x_nchw, w_oihw, gamma=None, beta=None, run_mean=None,
                      run_var=None, bias=None, *, use_batch_norm=True,
                      stride=1, padding=1, compute_dtype=jnp.bfloat16):
    """x_nchw: (N, Cin, H, W); w_oihw: (Cout, Cin, KH, KW). Returns (N, Cout, Ho, Wo) f32."""
    eps = 1e-5
    N, Cin, H, W = x_nchw.shape
    Cout, _, KH, KW = w_oihw.shape

    # ---- Fold BatchNorm(eval) into the conv: scale goes into the weights, shift stays.
    if use_batch_norm:
        inv_std = 1.0 / jnp.sqrt(run_var.astype(jnp.float32) + eps)
        scale = gamma.astype(jnp.float32) * inv_std                       # (Cout,)
        shift = beta.astype(jnp.float32) - run_mean.astype(jnp.float32) * scale
    else:
        scale = jnp.ones((Cout,), jnp.float32)
        shift = (bias.astype(jnp.float32) if bias is not None
                 else jnp.zeros((Cout,), jnp.float32))

    # (Cout, Cin, KH, KW) -> (KH, KW, Cin, Cout) -> (K, Cout), fold in f32, cast later.
    w_hwio = jnp.transpose(w_oihw.astype(jnp.float32), (2, 3, 1, 0))
    w2d = (w_hwio * scale[None, None, None, :]).reshape(KH * KW * Cin, Cout)

    # ---- im2col in NHWC; cast to bf16 FIRST so the ~9x-inflated patches are half-size.
    x_nhwc = jnp.transpose(x_nchw, (0, 2, 3, 1)).astype(compute_dtype)
    x_pad = jnp.pad(x_nhwc, ((0, 0), (padding, padding), (padding, padding), (0, 0)))
    Hp, Wp = H + 2 * padding, W + 2 * padding
    Ho = (Hp - KH) // stride + 1
    Wo = (Wp - KW) // stride + 1
    cols = []
    for kh in range(KH):
        for kw in range(KW):
            cols.append(
                lax.slice(
                    x_pad,
                    (0, kh, kw, 0),
                    (N, kh + (Ho - 1) * stride + 1, kw + (Wo - 1) * stride + 1, Cin),
                    strides=(1, stride, stride, 1),
                ))
    K = KH * KW * Cin
    M = Ho * Wo
    patches = jnp.concatenate(cols, axis=-1).reshape(N, M, K)

    # ---- Tile / pad to TPU-friendly shapes.
    LANES = 128
    # Output channels: lane-dense; TN=256 fills the 256-wide v6e/v7x MXU when possible.
    if Cout > LANES:
        TN = 2 * LANES
        Cp = _round_up(Cout, TN)
    else:
        TN = LANES
        Cp = LANES

    # Spatial rows: TM=512 for big maps; 16-aligned fallback for small maps (bf16 tile).
    TM = 512
    if M < TM:
        TM = max(16, _round_up(M, 16))
    # v7x has 2 TensorCores: ensure a "parallel" axis has >= 2 steps when batch == 1.
    if N == 1 and _round_up(M, TM) // TM < 2 and M > 16:
        TM = max(16, _round_up(-(-M // 2), 16))
    M_pad = _round_up(M, TM)

    # Reduction dim: keep the weight block VMEM-resident while small, else tile K so
    # double-buffered (patch + weight) tiles stay far under v7x's 64 MiB VMEM.
    MAX_TK = 2048
    if K <= MAX_TK:
        TK, K_pad = K, K
    else:
        TK = MAX_TK                                   # multiple of 128 (and of 16)
        K_pad = _round_up(K, TK)

    patches = jnp.pad(patches, ((0, 0), (0, M_pad - M), (0, K_pad - K)))
    w2d = jnp.pad(w2d, ((0, K_pad - K), (0, Cp - Cout))).astype(compute_dtype)
    shift_p = jnp.pad(shift, (0, Cp - Cout)).reshape(1, Cp)               # stays f32

    kernel = functools.partial(_cnn_block_kernel, apply_act=use_batch_norm)

    out = pl.pallas_call(
        kernel,
        # bf16 output: half the writeback bytes and half the output VMEM tile.
        out_shape=jax.ShapeDtypeStruct((N, M_pad, Cp), compute_dtype),
        grid_spec=pltpu.PrefetchScalarGridSpec(
            num_scalar_prefetch=0,
            grid=(N, M_pad // TM, Cp // TN, K_pad // TK),   # K innermost (reduction)
            in_specs=[
                pl.BlockSpec((1, TM, TK), lambda b, m, c, k: (b, m, k)),
                pl.BlockSpec((TK, TN), lambda b, m, c, k: (k, c)),
                pl.BlockSpec((1, TN), lambda b, m, c, k: (0, c)),
            ],
            out_specs=pl.BlockSpec((1, TM, TN), lambda b, m, c, k: (b, m, c)),
            scratch_shapes=[pltpu.VMEM((TM, TN), jnp.float32)],
        ),
        compiler_params=pltpu.CompilerParams(
            dimension_semantics=("parallel", "parallel", "parallel", "arbitrary"),
            # Well above this tiling's ~8 MiB footprint; raises v5e's 16 MiB scoped
            # default and stays safely under v7x's 64 MiB physical VMEM.
            vmem_limit_bytes=32 * 1024 * 1024,
        ),
    )(patches, w2d, shift_p)

    out = out[:, :M, :Cout].reshape(N, Ho, Wo, Cout)
    # TODO(synk): keep activations NHWC + bf16 across layers to drop slice/transpose/cast.
    return jnp.transpose(out, (0, 3, 1, 2)).astype(jnp.float32)          # NCHW f32


def _reference(x, w, gamma=None, beta=None, run_mean=None, run_var=None, bias=None,
               *, use_batch_norm=True, stride=1, padding=1):
    eps = 1e-5
    y = lax.conv_general_dilated(
        x.astype(jnp.float32), w.astype(jnp.float32),
        window_strides=(stride, stride),
        padding=[(padding, padding), (padding, padding)],
        dimension_numbers=("NCHW", "OIHW", "NCHW"),
    )
    if use_batch_norm:
        g = gamma.reshape(1, -1, 1, 1)
        b = beta.reshape(1, -1, 1, 1)
        m = run_mean.reshape(1, -1, 1, 1)
        v = run_var.reshape(1, -1, 1, 1)
        y = g * (y - m) / jnp.sqrt(v + eps) + b
        return jnp.where(y > 0, y, 0.1 * y)
    if bias is not None:
        y = y + bias.reshape(1, -1, 1, 1)
    return y


if __name__ == "__main__":
    key = jax.random.PRNGKey(0)
    k_x, k_w, k_g, k_b, k_m, k_v, k_bias = jax.random.split(key, 7)

    N, Cin, H, W = 2, 4, 16, 16
    Cout, KH, KW = 8, 3, 3

    x = jax.random.normal(k_x, (N, Cin, H, W), jnp.float32)
    # Conv weight (no bias when use_batch_norm=True), deterministic init.
    w = jax.random.normal(k_w, (Cout, Cin, KH, KW), jnp.float32) * 0.1
    # BatchNorm2d parameters / running stats (inference semantics).
    gamma = 1.0 + 0.1 * jax.random.normal(k_g, (Cout,), jnp.float32)
    beta = 0.1 * jax.random.normal(k_b, (Cout,), jnp.float32)
    run_mean = 0.05 * jax.random.normal(k_m, (Cout,), jnp.float32)
    run_var = 1.0 + 0.1 * jax.random.uniform(k_v, (Cout,), jnp.float32)
    bias = 0.1 * jax.random.normal(k_bias, (Cout,), jnp.float32)

    # Typical YOLO "same" block: kernel_size=3, stride=1, padding=1, BN + LeakyReLU.
    out = jax.block_until_ready(
        cnn_block_forward(x, w, gamma, beta, run_mean, run_var,
                          use_batch_norm=True, stride=1, padding=1))
    ref = _reference(x, w, gamma, beta, run_mean, run_var,
                     use_batch_norm=True, stride=1, padding=1)
    assert out.shape == (N, Cout, H, W), out.shape
    # bf16 MXU operands + bf16 output, f32 accumulation -> relaxed tolerance vs f32 ref.
    assert jnp.allclose(out, ref, rtol=2e-2, atol=2e-2), float(jnp.max(jnp.abs(out - ref)))

    # Downsampling block: kernel_size=3, stride=2, padding=1.
    out2 = jax.block_until_ready(
        cnn_block_forward(x, w, gamma, beta, run_mean, run_var,
                          use_batch_norm=True, stride=2, padding=1))
    ref2 = _reference(x, w, gamma, beta, run_mean, run_var,
                      use_batch_norm=True, stride=2, padding=1)
    assert out2.shape == (N, Cout, H // 2, W // 2), out2.shape
    assert jnp.allclose(out2, ref2, rtol=2e-2, atol=2e-2), float(jnp.max(jnp.abs(out2 - ref2)))

    # use_batch_norm=False path: conv + bias, no BN, no activation.
    out3 = jax.block_until_ready(
        cnn_block_forward(x, w, bias=bias, use_batch_norm=False, stride=1, padding=1))
    ref3 = _reference(x, w, bias=bias, use_batch_norm=False, stride=1, padding=1)
    assert out3.shape == (N, Cout, H, W), out3.shape
    assert jnp.allclose(out3, ref3, rtol=2e-2, atol=2e-2), float(jnp.max(jnp.abs(out3 - ref3)))

    print("KERNEL_OK")
</pallas_src>

<mosaic_0001>
module attributes {stable_mosaic.version = 11 : i64} {
  func.func @_cnn_block_kernel(%arg0: i32, %arg1: i32, %arg2: i32, %arg3: i32, %arg4: memref<1x256x36xbf16, #tpu.memory_space<vmem>>, %arg5: memref<36x128xbf16, #tpu.memory_space<vmem>>, %arg6: memref<1x128xf32, #tpu.memory_space<vmem>>, %arg7: memref<1x256x128xbf16, #tpu.memory_space<vmem>>, %arg8: memref<256x128xf32, #tpu.memory_space<vmem>>) attributes {dimension_semantics = [#tpu.dimension_semantics<parallel>, #tpu.dimension_semantics<parallel>, #tpu.dimension_semantics<parallel>, #tpu.dimension_semantics<arbitrary>], iteration_bounds = array<i64: 2, 1, 1, 1>, scalar_prefetch = 0 : i64, scratch_operands = 1 : i64, tpu.core_type = #tpu.core_type<tc>, window_params = [{transform_indices = @transform_0, window_bounds = array<i64: 1, 256, 36>}, {transform_indices = @transform_1, window_bounds = array<i64: 36, 128>}, {transform_indices = @transform_2, window_bounds = array<i64: 1, 128>}, {transform_indices = @transform_3, window_bounds = array<i64: 1, 256, 128>}]} {
    %c0_i32 = arith.constant 0 : i32
    %0 = arith.cmpi eq, %arg3, %c0_i32 : i32
    %1 = arith.extui %0 : i1 to i32
    %c0_i32_0 = arith.constant 0 : i32
    %2 = arith.cmpi ne, %1, %c0_i32_0 : i32
    scf.if %2 {
      %cst_11 = arith.constant 0.000000e+00 : f32
      %13 = vector.broadcast %cst_11 : f32 to vector<256x128xf32>
      %c0_12 = arith.constant 0 : index
      %c0_13 = arith.constant 0 : index
      %14 = vector.load %arg8[%c0_12, %c0_13] : memref<256x128xf32, #tpu.memory_space<vmem>>, vector<256x128xf32>
      tpu.vector_store %arg8[%c0_12, %c0_13], %13 {strides = array<i32>} : memref<256x128xf32, #tpu.memory_space<vmem>>, vector<256x128xf32>,
    } else {
    }
    %c0 = arith.constant 0 : index
    %c0_1 = arith.constant 0 : index
    %3 = vector.load %arg8[%c0, %c0_1] : memref<256x128xf32, #tpu.memory_space<vmem>>, vector<256x128xf32>
    %c0_2 = arith.constant 0 : index
    %c0_3 = arith.constant 0 : index
    %c0_4 = arith.constant 0 : index
    %4 = vector.load %arg4[%c0_2, %c0_3, %c0_4] : memref<1x256x36xbf16, #tpu.memory_space<vmem>>, vector<1x256x36xbf16>
    %5 = vector.shape_cast %4 : vector<1x256x36xbf16> to vector<256x36xbf16>
    %c0_5 = arith.constant 0 : index
    %c0_6 = arith.constant 0 : index
    %6 = vector.load %arg5[%c0_5, %c0_6] : memref<36x128xbf16, #tpu.memory_space<vmem>>, vector<36x128xbf16>
    %cst = arith.constant dense<0.000000e+00> : vector<256x128xf32>
    %7 = tpu.matmul %5, %6, %cst {dimension_numbers = #tpu.dot_dimension_numbers<[1], [0], [0], [1], [0, 0, 1, 1], [], []>} : vector<256x36xbf16>, vector<36x128xbf16>, vector<256x128xf32> -> vector<256x128xf32>
    %8 = arith.addf %3, %7 : vector<256x128xf32>
    %c0_7 = arith.constant 0 : index
    %c0_8 = arith.constant 0 : index
    %9 = vector.load %arg8[%c0_7, %c0_8] : memref<256x128xf32, #tpu.memory_space<vmem>>, vector<256x128xf32>
    tpu.vector_store %arg8[%c0_7, %c0_8], %8 {strides = array<i32>} : memref<256x128xf32, #tpu.memory_space<vmem>>, vector<256x128xf32>,
    %c0_i32_9 = arith.constant 0 : i32
    %10 = arith.cmpi eq, %arg3, %c0_i32_9 : i32
    %11 = arith.extui %10 : i1 to i32
    %c0_i32_10 = arith.constant 0 : i32
    %12 = arith.cmpi ne, %11, %c0_i32_10 : i32
    scf.if %12 {
      %c0_11 = arith.constant 0 : index
      %c0_12 = arith.constant 0 : index
      %13 = vector.load %arg8[%c0_11, %c0_12] : memref<256x128xf32, #tpu.memory_space<vmem>>, vector<256x128xf32>
      %c0_13 = arith.constant 0 : index
      %c0_14 = arith.constant 0 : index
      %14 = vector.load %arg6[%c0_13, %c0_14] : memref<1x128xf32, #tpu.memory_space<vmem>>, vector<1x128xf32>
      %15 = vector.broadcast %14 : vector<1x128xf32> to vector<256x128xf32>
      %16 = arith.addf %13, %15 : vector<256x128xf32>
      %cst_15 = arith.constant 1.000000e-01 : f32
      %17 = vector.broadcast %cst_15 : f32 to vector<256x128xf32>
      %18 = arith.mulf %17, %16 : vector<256x128xf32>
      %19 = arith.maximumf %16, %18 : vector<256x128xf32>
      %20 = arith.truncf %19 : vector<256x128xf32> to vector<256x128xbf16>
      %c0_16 = arith.constant 0 : index
      %c0_17 = arith.constant 0 : index
      %c0_18 = arith.constant 0 : index
      %21 = vector.load %arg7[%c0_16, %c0_17, %c0_18] : memref<1x256x128xbf16, #tpu.memory_space<vmem>>, vector<1x256x128xbf16>
      %22 = vector.shape_cast %21 : vector<1x256x128xbf16> to vector<256x128xbf16>
      %23 = vector.shape_cast %20 : vector<256x128xbf16> to vector<1x256x128xbf16>
      tpu.vector_store %arg7[%c0_16, %c0_17, %c0_18], %23 {strides = array<i32>} : memref<1x256x128xbf16, #tpu.memory_space<vmem>>, vector<1x256x128xbf16>,
    } else {
    }
    return
  }
  func.func @transform_0(%arg0: i32, %arg1: i32, %arg2: i32, %arg3: i32) -> (i32, i32, i32) {
    %c0_i32 = arith.constant 0 : i32
    return %arg0, %arg1, %arg3 : i32, i32, i32
  }
  func.func @transform_1(%arg0: i32, %arg1: i32, %arg2: i32, %arg3: i32) -> (i32, i32) {
    %c0_i32 = arith.constant 0 : i32
    return %arg3, %arg2 : i32, i32
  }
  func.func @transform_2(%arg0: i32, %arg1: i32, %arg2: i32, %arg3: i32) -> (i32, i32) {
    %c0_i32 = arith.constant 0 : i32
    %c0_i32_0 = arith.constant 0 : i32
    return %c0_i32, %arg2 : i32, i32
  }
  func.func @transform_3(%arg0: i32, %arg1: i32, %arg2: i32, %arg3: i32) -> (i32, i32, i32) {
    %c0_i32 = arith.constant 0 : i32
    return %arg0, %arg1, %arg2 : i32, i32, i32
  }
}

</mosaic_0001>

<llo_original>
// kernel: cnn_block_forward.1
$region0: #{cnn_block_forward.1}
  #allocation0 [shape = 'u32[]', space=smem, size = 0x4, offset = 0x4, fixed_abs, tag = 'smem constant byte address 0x4 - core index']
  #allocation1 [shape = 'u32[144,128]{1,0:T(1,128)}', space=vmem, size = 0x12000, scoped, tag = 'internal scratch']
  #allocation2 [shape = 'f32[256,128]{1,0:T(8,128)}', space=vmem, size = 0x20000, scoped, tag = 'scratch operand']
  %s0 = inlined_call_operand.vmem [shape: bf16[2,256,36], index: 0, kind: input, shape index: {}]
  %s1 = inlined_call_operand.vmem [shape: bf16[36,128], index: 1, kind: input, shape index: {}]
  %s2 = inlined_call_operand.vmem [shape: f32[1,128], index: 2, kind: input, shape index: {}]
  %s3 = inlined_call_operand.vmem [shape: bf16[2,256,128], index: 3, kind: output, shape index: {}]
  %s4 = sld [smem:[#allocation0]]
  $region53: #{cnn_block_forward.1} parent=0
    _
  %s6 = ssub.s32 1, %s4
  %s7 = scalar_select 0, %s6, %s4
  loop: start=0, step=1, limit=4
  $region2: #{cnn_block_forward.1} parent=0 // loop_pre_header
    _
  $region3: #{cnn_block_forward.1} parent=0 // loop_header
    %s9 = sphi 0, %s13
    %p10 = scmp.ge.s32.totalorder %s9, 4
    %s16 = sphi 0, %s42
    %s17 = sphi 0, %s38
    %s18 = sphi 0, %s34
    %s19 = sphi 0, %s30
    %s20 = sphi 0, %s16
    %s21 = sphi 0, %s17
    %s22 = sphi 0, %s18
    %s23 = sphi 0, %s19
    %s24 = sphi 0, %s20
    %s25 = sphi 0, %s21
    %s26 = sphi 0, %s22
    %s27 = sphi 0, %s23
    %s49 = sphi 0, %s51
    %s52 = sphi 0, %s49
    %s53 = sphi 0, %s52
    %s69 = sphi 0, %s53
    %s77 = sphi 0, %s79
    %s80 = sphi 0, %s77
    %s81 = sphi 0, %s80
    %s97 = sphi 0, %s81
    %s103 = sphi 0, %s105
    %s106 = sphi 0, %s103
    %s107 = sphi 0, %s106
    %s123 = sphi 0, %s107
    %s133 = sphi 0, %s135
    %s136 = sphi 0, %s133
    %s137 = sphi 0, %s136
    %s153 = sphi 0, %s137
  $region4: #{cnn_block_forward.1} parent=0 // loop_header_branch
    %12 = sbr.rel (%p10) target = $region8
  $region5: #{cnn_block_forward.1} parent=0 // loop_body
    %s14 = ssub.s32 %s9, 1
    %s15 = ssub.s32 %s9, 2
    %s28 = sadd.s32 1, %s19
    %p29 = scmp.ge.s32.totalorder %s28, 1
    %s30 = scalar_select %p29, 0, %s28
    %s31 = sadd.s32 1, %s18
    %s32 = scalar_select %p29, %s31, %s18
    %p33 = scmp.ge.s32.totalorder %s32, 1
    %s34 = scalar_select %p33, 0, %s32
    %s35 = sadd.s32 1, %s17
    %s36 = scalar_select %p33, %s35, %s17
    %p37 = scmp.ge.s32.totalorder %s36, 1
    %s38 = scalar_select %p37, 0, %s36
    %s39 = sadd.s32 1, %s16
    %s40 = scalar_select %p37, %s39, %s16
    %p41 = scmp.ge.s32.totalorder %s40, 2
    %s42 = scalar_select %p41, 0, %s40
    %s43 = ssub.s32 %s16, %s42
    %s44 = ssub.s32 %s17, %s38
    %s45 = sor.u32 %s43, %s44
    %s46 = ssub.s32 %s19, %s30
    %s47 = sor.u32 %s45, %s46
    %p48 = scmp.eq.s32.totalorder %s47, 0
    %s50 = sadd.s32 %s49, 1
    %s51 = scalar_select %p48, %s49, %s50
    %p54 = pneg %p48
    %p55 = scmp.eq.s32.totalorder %s9, 1
    %p56 = por %p54, %p55
    %p57 = scmp.ne.s32.totalorder %s49, %s52
    %p58 = scmp.eq.s32.totalorder %s9, 0
    %p59 = por %p57, %p58
    %p60 = scmp.ne.s32.totalorder %s49, %s52
    %p61 = scmp.eq.s32.totalorder %s14, 1
    %p62 = por %p60, %p61
    %p63 = scmp.ne.s32.totalorder %s52, %s53
    %p64 = scmp.eq.s32.totalorder %s14, 0
    %p65 = por %p63, %p64
    %p66 = scmp.ne.s32.totalorder %s52, %s53
    %p67 = scmp.eq.s32.totalorder %s15, 1
    %p68 = por %p66, %p67
    %p70 = scmp.ne.s32.totalorder %s53, %s69
    %p71 = scmp.eq.s32.totalorder %s15, 0
    %p72 = por %p70, %p71
    %s73 = ssub.s32 %s19, %s30
    %s74 = ssub.s32 %s18, %s34
    %s75 = sor.u32 %s73, %s74
    %p76 = scmp.eq.s32.totalorder %s75, 0
    %s78 = sadd.s32 %s77, 1
    %s79 = scalar_select %p76, %s77, %s78
    %p82 = pneg %p76
    %p83 = scmp.eq.s32.totalorder %s9, 1
    %p84 = por %p82, %p83
    %p85 = scmp.ne.s32.totalorder %s77, %s80
    %p86 = scmp.eq.s32.totalorder %s9, 0
    %p87 = por %p85, %p86
    %p88 = scmp.ne.s32.totalorder %s77, %s80
    %p89 = scmp.eq.s32.totalorder %s14, 1
    %p90 = por %p88, %p89
    %p91 = scmp.ne.s32.totalorder %s80, %s81
    %p92 = scmp.eq.s32.totalorder %s14, 0
    %p93 = por %p91, %p92
    %p94 = scmp.ne.s32.totalorder %s80, %s81
    %p95 = scmp.eq.s32.totalorder %s15, 1
    %p96 = por %p94, %p95
    %p98 = scmp.ne.s32.totalorder %s81, %s97
    %p99 = scmp.eq.s32.totalorder %s15, 0
    %p100 = por %p98, %p99
    %s101 = ssub.s32 %s18, %s34
    %p102 = scmp.eq.s32.totalorder %s101, 0
    %s104 = sadd.s32 %s103, 1
    %s105 = scalar_select %p102, %s103, %s104
    %p108 = pneg %p102
    %p109 = scmp.eq.s32.totalorder %s9, 1
    %p110 = por %p108, %p109
    %p111 = scmp.ne.s32.totalorder %s103, %s106
    %p112 = scmp.eq.s32.totalorder %s9, 0
    %p113 = por %p111, %p112
    %p114 = scmp.ne.s32.totalorder %s103, %s106
    %p115 = scmp.eq.s32.totalorder %s14, 1
    %p116 = por %p114, %p115
    %p117 = scmp.ne.s32.totalorder %s106, %s107
    %p118 = scmp.eq.s32.totalorder %s14, 0
    %p119 = por %p117, %p118
    %p120 = scmp.ne.s32.totalorder %s106, %s107
    %p121 = scmp.eq.s32.totalorder %s15, 1
    %p122 = por %p120, %p121
    %p124 = scmp.ne.s32.totalorder %s107, %s123
    %p125 = scmp.eq.s32.totalorder %s15, 0
    %p126 = por %p124, %p125
    %s127 = ssub.s32 %s16, %s42
    %s128 = ssub.s32 %s17, %s38
    %s129 = sor.u32 %s127, %s128
    %s130 = ssub.s32 %s18, %s34
    %s131 = sor.u32 %s129, %s130
    %p132 = scmp.eq.s32.totalorder %s131, 0
    %s134 = sadd.s32 %s133, 1
    %s135 = scalar_select %p132, %s133, %s134
    %p138 = pneg %p132
    %p139 = scmp.eq.s32.totalorder %s9, 1
    %p140 = por %p138, %p139
    %p141 = scmp.ne.s32.totalorder %s133, %s136
    %p142 = scmp.eq.s32.totalorder %s9, 0
    %p143 = por %p141, %p142
    %p144 = scmp.ne.s32.totalorder %s133, %s136
    %p145 = scmp.eq.s32.totalorder %s14, 1
    %p146 = por %p144, %p145
    %p147 = scmp.ne.s32.totalorder %s136, %s137
    %p148 = scmp.eq.s32.totalorder %s14, 0
    %p149 = por %p147, %p148
    %p150 = scmp.ne.s32.totalorder %s136, %s137
    %p151 = scmp.eq.s32.totalorder %s15, 1
    %p152 = por %p150, %p151
    %p154 = scmp.ne.s32.totalorder %s137, %s153
    %p155 = scmp.eq.s32.totalorder %s15, 0
    %p156 = por %p154, %p155
    %p157 = scmp.le.s32.totalorder 1, %s9
    %p158 = scmp.lt.s32.totalorder %s9, 3
    %p159 = pnand %p157, %p158
    %p160 = pneg %p159
    // Predicated region
    $region9: #{cnn_block_forward.1} parent=5 // pred_check
      _
    $region10: #{cnn_block_forward.1} parent=5 // pred_check_branch
      %162 = sbr.rel (%p159) target = $region12
    $region11: #{cnn_block_forward.1} parent=5 // pred_region
      %s163 = ssub.s32 %s9, 1
      // Predicated region
      $region13: #{cnn_block_forward.1} parent=11 // pred_check
        %p164 = pneg %p93
      $region14: #{cnn_block_forward.1} parent=11 // pred_check_branch
        %166 = sbr.rel (%p164) target = $region16
      $region15: #{cnn_block_forward.1} parent=11 // pred_region
        %s167 = smul.u32 5, %s23
        %p168 = scmp.lt.s32.totalorder %s167, 4
        %s169 = scalar_select %p168, %s167, 4
        %p170 = scmp.lt.s32.totalorder %s22, 0
        %s171 = scalar_select %p170, %s22, 0
        %s172 = sadd.s32 %s171, %s169
        %s173 = smul.addr %s172, 4
        %s174 = scalar_lea.vmem %s1, %s173
        %s175 = smul.u32 5, %s23
      $region16: #{cnn_block_forward.1} parent=11 // pred_fallthru
        _
      // Predicated region
      $region17: #{cnn_block_forward.1} parent=11 // pred_check
        %p176 = pneg %p119
      $region18: #{cnn_block_forward.1} parent=11 // pred_check_branch
        %178 = sbr.rel (%p176) target = $region20
      $region19: #{cnn_block_forward.1} parent=11 // pred_region
        %p179 = scmp.lt.s32.totalorder %s22, 0
        %s180 = scalar_select %p179, %s22, 0
        %s181 = scalar_lea.vmem %s2, %s180
      $region20: #{cnn_block_forward.1} parent=11 // pred_fallthru
        _
    $region12: #{cnn_block_forward.1} parent=5 // pred_fallthru
      _
    %p182 = scmp.lt.s32.totalorder %s9, 2
    // Predicated region
    $region21: #{cnn_block_forward.1} parent=5 // pred_check
      %p183 = pneg %p182
    $region22: #{cnn_block_forward.1} parent=5 // pred_check_branch
      %185 = sbr.rel (%p183) target = $region24
    $region23: #{cnn_block_forward.1} parent=5 // pred_region
      // Predicated region
      $region25: #{cnn_block_forward.1} parent=23 // pred_check
        %p186 = pneg %p59
      $region26: #{cnn_block_forward.1} parent=23 // pred_check_branch
        %188 = sbr.rel (%p186) target = $region28
      $region27: #{cnn_block_forward.1} parent=23 // pred_region
        %s189 = smul.u32 32, %s17
        %p190 = scmp.lt.s32.totalorder %s16, 1
        %s191 = scalar_select %p190, %s16, 1
        %p192 = scmp.lt.s32.totalorder %s189, 31
        %s193 = scalar_select %p192, %s189, 31
        %p194 = scmp.lt.s32.totalorder %s19, 0
        %s195 = scalar_select %p194, %s19, 0
        %s196 = sadd.s32 %s195, %s193
        %s197 = smul.addr %s191, 32
        %s198 = sadd.s32 %s196, %s197
        %s199 = smul.addr %s198, 4
        %s200 = scalar_lea.vmem %s0, %s199
        %s201 = smul.u32 32, %s17
      $region28: #{cnn_block_forward.1} parent=23 // pred_fallthru
        _
    $region24: #{cnn_block_forward.1} parent=5 // pred_fallthru
      _
    %p202 = scmp.le.s32.totalorder 1, %s9
    %p203 = scmp.lt.s32.totalorder %s9, 3
    %p204 = pnand %p202, %p203
    %p205 = pneg %p204
    // Predicated region
    $region29: #{cnn_block_forward.1} parent=5 // pred_check
      _
    $region30: #{cnn_block_forward.1} parent=5 // pred_check_branch
      %207 = sbr.rel (%p204) target = $region32
    $region31: #{cnn_block_forward.1} parent=5 // pred_region
      %s208 = ssub.s32 %s9, 1
      %s209 = smul.u32 32, %s21
      %p210 = scmp.lt.s32.totalorder %s20, 1
      %s211 = scalar_select %p210, %s20, 1
      %p212 = scmp.lt.s32.totalorder %s209, 31
      %s213 = scalar_select %p212, %s209, 31
      %p214 = scmp.lt.s32.totalorder %s23, 0
      %s215 = scalar_select %p214, %s23, 0
      %s216 = sadd.s32 %s215, %s213
      %s217 = smul.addr %s211, 32
      %s218 = sadd.s32 %s216, %s217
      %s219 = smul.addr %s218, 4
      %s220 = scalar_lea.vmem %s0, %s219
      %p221 = pneg %p65
      %p222 = pneg %p62
      %s223 = smul.u32 5, %s23
      %p224 = scmp.lt.s32.totalorder %s223, 4
      %s225 = scalar_select %p224, %s223, 4
      %p226 = scmp.lt.s32.totalorder %s22, 0
      %s227 = scalar_select %p226, %s22, 0
      %s228 = sadd.s32 %s227, %s225
      %s229 = smul.addr %s228, 4
      %s230 = scalar_lea.vmem %s1, %s229
      %p231 = pneg %p93
      %p232 = pneg %p90
      %p233 = scmp.lt.s32.totalorder %s22, 0
      %s234 = scalar_select %p233, %s22, 0
      %s235 = scalar_lea.vmem %s2, %s234
      %p236 = pneg %p119
      %p237 = pneg %p116
      %p238 = pneg %p149
      %p239 = pneg %p146
      %s240 = smul.u32 32, %s21
      %p241 = scmp.lt.s32.totalorder %s20, 1
      %s242 = scalar_select %p241, %s20, 1
      %p243 = scmp.lt.s32.totalorder %s240, 31
      %s244 = scalar_select %p243, %s240, 31
      %p245 = scmp.lt.s32.totalorder %s22, 0
      %s246 = scalar_select %p245, %s22, 0
      %s247 = sadd.s32 %s246, %s244
      %s248 = smul.addr %s242, 32
      %s249 = sadd.s32 %s247, %s248
      %s250 = smul.addr %s249, 4
      %s251 = scalar_lea.vmem %s3, %s250
      %s252 = smul.u32 32, %s21
      %p253 = scmp.lt.s32.totalorder %s20, 1
      %s254 = scalar_select %p253, %s20, 1
      %p255 = scmp.lt.s32.totalorder %s252, 31
      %s256 = scalar_select %p255, %s252, 31
      %p257 = scmp.lt.s32.totalorder %s23, 0
      %s258 = scalar_select %p257, %s23, 0
      %s259 = sadd.s32 %s258, %s256
      %s260 = smul.addr %s254, 32
      %s261 = sadd.s32 %s259, %s260
      %s262 = smul.addr %s261, 4
      %s263 = scalar_lea.vmem %s0, %s262
      %s264 = smul.u32 32, %s21
      %s265 = smul.u32 5, %s23
      %p266 = scmp.lt.s32.totalorder %s265, 4
      %s267 = scalar_select %p266, %s265, 4
      %p268 = scmp.lt.s32.totalorder %s22, 0
      %s269 = scalar_select %p268, %s22, 0
      %s270 = sadd.s32 %s269, %s267
      %s271 = smul.addr %s270, 4
      %s272 = scalar_lea.vmem %s1, %s271
      %s273 = smul.u32 5, %s23
      %p274 = scmp.lt.s32.totalorder %s22, 0
      %s275 = scalar_select %p274, %s22, 0
      %s276 = scalar_lea.vmem %s2, %s275
      %s277 = smul.u32 32, %s21
      %p278 = scmp.lt.s32.totalorder %s20, 1
      %s279 = scalar_select %p278, %s20, 1
      %p280 = scmp.lt.s32.totalorder %s277, 31
      %s281 = scalar_select %p280, %s277, 31
      %p282 = scmp.lt.s32.totalorder %s22, 0
      %s283 = scalar_select %p282, %s22, 0
      %s284 = sadd.s32 %s283, %s281
      %s285 = smul.addr %s279, 32
      %s286 = sadd.s32 %s284, %s285
      %s287 = smul.addr %s286, 4
      %s288 = scalar_lea.vmem %s3, %s287
      %s289 = smul.u32 32, %s21
      %p291 = scmp.eq.s32.totalorder %s23, 0
      // Predicated region
      $region33: #{cnn_block_forward.1} parent=31 // pred_check
        %p292 = pneg %p291
      $region34: #{cnn_block_forward.1} parent=31 // pred_check_branch
        %294 = sbr.rel (%p292) target = $region36
      $region35: #{cnn_block_forward.1} parent=31 // pred_region
        %295 = vst [vmem:[#allocation2] sm:$0xff] 0.0
        %296 = vst [vmem:[#allocation2 + $0x8] sm:$0xff] 0.0
        %297 = vst [vmem:[#allocation2 + $0x10] sm:$0xff] 0.0
        %298 = vst [vmem:[#allocation2 + $0x18] sm:$0xff] 0.0
        %299 = vst [vmem:[#allocation2 + $0x20] sm:$0xff] 0.0
        %300 = vst [vmem:[#allocation2 + $0x28] sm:$0xff] 0.0
        %301 = vst [vmem:[#allocation2 + $0x30] sm:$0xff] 0.0
        %302 = vst [vmem:[#allocation2 + $0x38] sm:$0xff] 0.0
        %303 = vst [vmem:[#allocation2 + $0x40] sm:$0xff] 0.0
        %304 = vst [vmem:[#allocation2 + $0x48] sm:$0xff] 0.0
        %305 = vst [vmem:[#allocation2 + $0x50] sm:$0xff] 0.0
        %306 = vst [vmem:[#allocation2 + $0x58] sm:$0xff] 0.0
        %307 = vst [vmem:[#allocation2 + $0x60] sm:$0xff] 0.0
        %308 = vst [vmem:[#allocation2 + $0x68] sm:$0xff] 0.0
        %309 = vst [vmem:[#allocation2 + $0x70] sm:$0xff] 0.0
        %310 = vst [vmem:[#allocation2 + $0x78] sm:$0xff] 0.0
        %311 = vst [vmem:[#allocation2 + $0x80] sm:$0xff] 0.0
        %312 = vst [vmem:[#allocation2 + $0x88] sm:$0xff] 0.0
        %313 = vst [vmem:[#allocation2 + $0x90] sm:$0xff] 0.0
        %314 = vst [vmem:[#allocation2 + $0x98] sm:$0xff] 0.0
        %315 = vst [vmem:[#allocation2 + $0xa0] sm:$0xff] 0.0
        %316 = vst [vmem:[#allocation2 + $0xa8] sm:$0xff] 0.0
        %317 = vst [vmem:[#allocation2 + $0xb0] sm:$0xff] 0.0
        %318 = vst [vmem:[#allocation2 + $0xb8] sm:$0xff] 0.0
        %319 = vst [vmem:[#allocation2 + $0xc0] sm:$0xff] 0.0
        %320 = vst [vmem:[#allocation2 + $0xc8] sm:$0xff] 0.0
        %321 = vst [vmem:[#allocation2 + $0xd0] sm:$0xff] 0.0
        %322 = vst [vmem:[#allocation2 + $0xd8] sm:$0xff] 0.0
        %323 = vst [vmem:[#allocation2 + $0xe0] sm:$0xff] 0.0
        %324 = vst [vmem:[#allocation2 + $0xe8] sm:$0xff] 0.0
        %325 = vst [vmem:[#allocation2 + $0xf0] sm:$0xff] 0.0
        %326 = vst [vmem:[#allocation2 + $0xf8] sm:$0xff] 0.0
      $region36: #{cnn_block_forward.1} parent=31 // pred_fallthru
        _
      %v327 = vld [vmem:[#allocation2] sm:$0xff]
      %v328 = vld [vmem:[#allocation2 + $0x8] sm:$0xff]
      %v329 = vld [vmem:[#allocation2 + $0x10] sm:$0xff]
      %v330 = vld [vmem:[#allocation2 + $0x18] sm:$0xff]
      %v331 = vld [vmem:[#allocation2 + $0x20] sm:$0xff]
      %v332 = vld [vmem:[#allocation2 + $0x28] sm:$0xff]
      %v333 = vld [vmem:[#allocation2 + $0x30] sm:$0xff]
      %v334 = vld [vmem:[#allocation2 + $0x38] sm:$0xff]
      %v335 = vld [vmem:[#allocation2 + $0x40] sm:$0xff]
      %v336 = vld [vmem:[#allocation2 + $0x48] sm:$0xff]
      %v337 = vld [vmem:[#allocation2 + $0x50] sm:$0xff]
      %v338 = vld [vmem:[#allocation2 + $0x58] sm:$0xff]
      %v339 = vld [vmem:[#allocation2 + $0x60] sm:$0xff]
      %v340 = vld [vmem:[#allocation2 + $0x68] sm:$0xff]
      %v341 = vld [vmem:[#allocation2 + $0x70] sm:$0xff]
      %v342 = vld [vmem:[#allocation2 + $0x78] sm:$0xff]
      %v343 = vld [vmem:[#allocation2 + $0x80] sm:$0xff]
      %v344 = vld [vmem:[#allocation2 + $0x88] sm:$0xff]
      %v345 = vld [vmem:[#allocation2 + $0x90] sm:$0xff]
      %v346 = vld [vmem:[#allocation2 + $0x98] sm:$0xff]
      %v347 = vld [vmem:[#allocation2 + $0xa0] sm:$0xff]
      %v348 = vld [vmem:[#allocation2 + $0xa8] sm:$0xff]
      %v349 = vld [vmem:[#allocation2 + $0xb0] sm:$0xff]
      %v350 = vld [vmem:[#allocation2 + $0xb8] sm:$0xff]
      %v351 = vld [vmem:[#allocation2 + $0xc0] sm:$0xff]
      %v352 = vld [vmem:[#allocation2 + $0xc8] sm:$0xff]
      %v353 = vld [vmem:[#allocation2 + $0xd0] sm:$0xff]
      %v354 = vld [vmem:[#allocation2 + $0xd8] sm:$0xff]
      %v355 = vld [vmem:[#allocation2 + $0xe0] sm:$0xff]
      %v356 = vld [vmem:[#allocation2 + $0xe8] sm:$0xff]
      %v357 = vld [vmem:[#allocation2 + $0xf0] sm:$0xff]
      %v358 = vld [vmem:[#allocation2 + $0xf8] sm:$0xff]
      %v359 = vld [vmem:[%s263] sm:$0xf]
      %v360 = vld [vmem:[%s263 + $0x4] sm:$0xf]
      %v361 = vld [vmem:[%s263 + $0x8] sm:$0xf]
      %v362 = vld [vmem:[%s263 + $0xc] sm:$0xf]
      %v363 = vld [vmem:[%s263 + $0x10] sm:$0xf]
      %v364 = vld [vmem:[%s263 + $0x14] sm:$0xf]
      %v365 = vld [vmem:[%s263 + $0x18] sm:$0xf]
      %v366 = vld [vmem:[%s263 + $0x1c] sm:$0xf]
      %v367 = vld [vmem:[%s263 + $0x20] sm:$0xf]
      %v368 = vld [vmem:[%s263 + $0x24] sm:$0xf]
      %v369 = vld [vmem:[%s263 + $0x28] sm:$0xf]
      %v370 = vld [vmem:[%s263 + $0x2c] sm:$0xf]
      %v371 = vld [vmem:[%s263 + $0x30] sm:$0xf]
      %v372 = vld [vmem:[%s263 + $0x34] sm:$0xf]
      %v373 = vld [vmem:[%s263 + $0x38] sm:$0xf]
      %v374 = vld [vmem:[%s263 + $0x3c] sm:$0xf]
      %v375 = vld [vmem:[%s263 + $0x40] sm:$0xf]
      %v376 = vld [vmem:[%s263 + $0x44] sm:$0xf]
      %v377 = vld [vmem:[%s263 + $0x48] sm:$0xf]
      %v378 = vld [vmem:[%s263 + $0x4c] sm:$0xf]
      %v379 = vld [vmem:[%s263 + $0x50] sm:$0xf]
      %v380 = vld [vmem:[%s263 + $0x54] sm:$0xf]
      %v381 = vld [vmem:[%s263 + $0x58] sm:$0xf]
      %v382 = vld [vmem:[%s263 + $0x5c] sm:$0xf]
      %v383 = vld [vmem:[%s263 + $0x60] sm:$0xf]
      %v384 = vld [vmem:[%s263 + $0x64] sm:$0xf]
      %v385 = vld [vmem:[%s263 + $0x68] sm:$0xf]
      %v386 = vld [vmem:[%s263 + $0x6c] sm:$0xf]
      %v387 = vld [vmem:[%s263 + $0x70] sm:$0xf]
      %v388 = vld [vmem:[%s263 + $0x74] sm:$0xf]
      %v389 = vld [vmem:[%s263 + $0x78] sm:$0xf]
      %v390 = vld [vmem:[%s263 + $0x7c] sm:$0xf]
      %v391 = vld [vmem:[%s272] sm:$0xf]
      %v392 = vld [vmem:[%s272 + $0x4] sm:$0xf]
      %v393 = vld [vmem:[%s272 + $0x8] sm:$0xf]
      %v394 = vld [vmem:[%s272 + $0xc] sm:$0xf]
      %v395 = vld [vmem:[%s272 + $0x10] sm:$0x3]
      %v428 = vunpack.c.l.b16 %v359
      %v429 = vunpack.c.l.b16 %v360
      %v430 = vunpack.c.l.b16 %v361
      %v431 = vunpack.c.l.b16 %v362
      %v432 = vunpack.c.l.b16 %v363
      %v433 = vunpack.c.l.b16 %v364
      %v434 = vunpack.c.l.b16 %v365
      %v435 = vunpack.c.l.b16 %v366
      %v436 = vunpack.c.l.b16 %v367
      %v437 = vunpack.c.l.b16 %v368
      %v438 = vunpack.c.l.b16 %v369
      %v439 = vunpack.c.l.b16 %v370
      %v440 = vunpack.c.l.b16 %v371
      %v441 = vunpack.c.l.b16 %v372
      %v442 = vunpack.c.l.b16 %v373
      %v443 = vunpack.c.l.b16 %v374
      %v444 = vunpack.c.l.b16 %v375
      %v445 = vunpack.c.l.b16 %v376
      %v446 = vunpack.c.l.b16 %v377
      %v447 = vunpack.c.l.b16 %v378
      %v448 = vunpack.c.l.b16 %v379
      %v449 = vunpack.c.l.b16 %v380
      %v450 = vunpack.c.l.b16 %v381
      %v451 = vunpack.c.l.b16 %v382
      %v452 = vunpack.c.l.b16 %v383
      %v453 = vunpack.c.l.b16 %v384
      %v454 = vunpack.c.l.b16 %v385
      %v455 = vunpack.c.l.b16 %v386
      %v456 = vunpack.c.l.b16 %v387
      %v457 = vunpack.c.l.b16 %v388
      %v458 = vunpack.c.l.b16 %v389
      %v459 = vunpack.c.l.b16 %v390
      %v460 = vpack.c.b16 %v429, %v428
      %v461 = vpack.c.b16 %v431, %v430
      %v462 = vpack.c.b16 %v433, %v432
      %v463 = vpack.c.b16 %v435, %v434
      %v464 = vpack.c.b16 %v437, %v436
      %v465 = vpack.c.b16 %v439, %v438
      %v466 = vpack.c.b16 %v441, %v440
      %v467 = vpack.c.b16 %v443, %v442
      %v468 = vpack.c.b16 %v445, %v444
      %v469 = vpack.c.b16 %v447, %v446
      %v470 = vpack.c.b16 %v449, %v448
      %v471 = vpack.c.b16 %v451, %v450
      %v472 = vpack.c.b16 %v453, %v452
      %v473 = vpack.c.b16 %v455, %v454
      %v474 = vpack.c.b16 %v457, %v456
      %v475 = vpack.c.b16 %v459, %v458
      %v481 = vunpack.c.l.b16 %v391
      %v482 = vunpack.c.l.b16 %v392
      %v483 = vunpack.c.l.b16 %v393
      %v484 = vunpack.c.l.b16 %v394
      %v485 = vunpack.c.l.b16 %v395
      %v486 = vpack.c.b16 %v482, %v481
      %v487 = vpack.c.b16 %v484, %v483
      %v488 = vpack.c.b16 %v485, %v485
      %vm491 = vcmask 293888
      %v493 = vsel %vm491, %v460, 0
      %v496 = vsel %vm491, %v461, 0
      %v499 = vsel %vm491, %v462, 0
      %v502 = vsel %vm491, %v463, 0
      %v505 = vsel %vm491, %v464, 0
      %v508 = vsel %vm491, %v465, 0
      %v511 = vsel %vm491, %v466, 0
      %v514 = vsel %vm491, %v467, 0
      %v517 = vsel %vm491, %v468, 0
      %v520 = vsel %vm491, %v469, 0
      %v523 = vsel %vm491, %v470, 0
      %v526 = vsel %vm491, %v471, 0
      %v529 = vsel %vm491, %v472, 0
      %v532 = vsel %vm491, %v473, 0
      %v535 = vsel %vm491, %v474, 0
      %v538 = vsel %vm491, %v475, 0
      %vm540 = vcmask 1041408
      %v542 = vsel %vm540, %v488, 0
      %544 = vmatprep.subr.bf16.mxu0 0
      %545 = vmatpush1.bf16.msra.mxu0 %v486
      %546 = vmatprep.subr.bf16.mxu0 0
      %547 = vmatpush1.bf16.msra.mxu0 %v487
      %548 = vmatprep.subr.bf16.mxu0 0
      %549 = vmatpush1.bf16.msra.mxu0 %v542
      %550 = vmatprep.subr.bf16.mxu0 0
      %551 = vmatpush1.bf16.msra.mxu0 0
      %552 = vmatprep.subr.bf16.mxu0 0
      %553 = vmatpush1.bf16.msra.mxu0 0
      %554 = vmatprep.subr.bf16.mxu0 0
      %555 = vmatpush1.bf16.msra.mxu0 0
      %556 = vmatprep.subr.bf16.mxu0 0
      %557 = vmatpush1.bf16.msra.mxu0 0
      %558 = vmatprep.subr.bf16.mxu0 0
      %559 = vmatpush1.bf16.msra.mxu0 0
      %560 = vmatprep.subr.bf16.mxu0 0
      %561 = vmatpush1.bf16.msra.mxu0 0
      %562 = vmatprep.subr.bf16.mxu0 0
      %563 = vmatpush1.bf16.msra.mxu0 0
      %564 = vmatprep.subr.bf16.mxu0 0
      %565 = vmatpush1.bf16.msra.mxu0 0
      %566 = vmatprep.subr.bf16.mxu0 0
      %567 = vmatpush1.bf16.msra.mxu0 0
      %568 = vmatprep.subr.bf16.mxu0 0
      %569 = vmatpush1.bf16.msra.mxu0 0
      %570 = vmatprep.subr.bf16.mxu0 0
      %571 = vmatpush1.bf16.msra.mxu0 0
      %572 = vmatprep.subr.bf16.mxu0 0
      %573 = vmatpush1.bf16.msra.mxu0 0
      %574 = vmatprep.subr.bf16.mxu0 0
      %575 = vmatpush1.bf16.msra.mxu0 0
      %576 = vmatprep.mubr.bf16.mxu0 0
      %577 = vmatmul.mubr.bf16.gmra.mrb[0].mxu0 %v493
      %v578 = vpop.f32.mrb[0].mxu0
      %v579 = vadd.f32 0.0, %v578
      %v580 = vpop.f32.mrb[0].mxu0
      %v581 = vpop.f32.mrb[0].mxu0
      %v582 = vadd.f32 0.0, %v581
      %v583 = vpop.f32.mrb[0].mxu0
      %584 = vmatprep.mubr.bf16.mxu0 0
      %585 = vmatmul.mubr.bf16.gmra.mrb[0].mxu0 %v496
      %v586 = vpop.f32.mrb[0].mxu0
      %v587 = vadd.f32 0.0, %v586
      %v588 = vpop.f32.mrb[0].mxu0
      %v589 = vpop.f32.mrb[0].mxu0
      %v590 = vadd.f32 0.0, %v589
      %v591 = vpop.f32.mrb[0].mxu0
      %592 = vmatprep.mubr.bf16.mxu0 0
      %593 = vmatmul.mubr.bf16.gmra.mrb[0].mxu0 %v499
      %v594 = vpop.f32.mrb[0].mxu0
      %v595 = vadd.f32 0.0, %v594
      %v596 = vpop.f32.mrb[0].mxu0
      %v597 = vpop.f32.mrb[0].mxu0
      %v598 = vadd.f32 0.0, %v597
      %v599 = vpop.f32.mrb[0].mxu0
      %600 = vmatprep.mubr.bf16.mxu0 0
      %601 = vmatmul.mubr.bf16.gmra.mrb[0].mxu0 %v502
      %v602 = vpop.f32.mrb[0].mxu0
      %v603 = vadd.f32 0.0, %v602
      %v604 = vpop.f32.mrb[0].mxu0
      %v605 = vpop.f32.mrb[0].mxu0
      %v606 = vadd.f32 0.0, %v605
      %v607 = vpop.f32.mrb[0].mxu0
      %608 = vmatprep.mubr.bf16.mxu0 0
      %609 = vmatmul.mubr.bf16.gmra.mrb[0].mxu0 %v505
      %v610 = vpop.f32.mrb[0].mxu0
      %v611 = vadd.f32 0.0, %v610
      %v612 = vpop.f32.mrb[0].mxu0
      %v613 = vpop.f32.mrb[0].mxu0
      %v614 = vadd.f32 0.0, %v613
      %v615 = vpop.f32.mrb[0].mxu0
      %616 = vmatprep.mubr.bf16.mxu0 0
      %617 = vmatmul.mubr.bf16.gmra.mrb[0].mxu0 %v508
      %v618 = vpop.f32.mrb[0].mxu0
      %v619 = vadd.f32 0.0, %v618
      %v620 = vpop.f32.mrb[0].mxu0
      %v621 = vpop.f32.mrb[0].mxu0
      %v622 = vadd.f32 0.0, %v621
      %v623 = vpop.f32.mrb[0].mxu0
      %624 = vmatprep.mubr.bf16.mxu0 0
      %625 = vmatmul.mubr.bf16.gmra.mrb[0].mxu0 %v511
      %v626 = vpop.f32.mrb[0].mxu0
      %v627 = vadd.f32 0.0, %v626
      %v628 = vpop.f32.mrb[0].mxu0
      %v629 = vpop.f32.mrb[0].mxu0
      %v630 = vadd.f32 0.0, %v629
      %v631 = vpop.f32.mrb[0].mxu0
      %632 = vmatprep.mubr.bf16.mxu0 0
      %633 = vmatmul.mubr.bf16.gmra.mrb[0].mxu0 %v514
      %v634 = vpop.f32.mrb[0].mxu0
      %v635 = vadd.f32 0.0, %v634
      %v636 = vpop.f32.mrb[0].mxu0
      %v637 = vpop.f32.mrb[0].mxu0
      %v638 = vadd.f32 0.0, %v637
      %v639 = vpop.f32.mrb[0].mxu0
      %640 = vmatprep.mubr.bf16.mxu0 0
      %641 = vmatmul.mubr.bf16.gmra.mrb[0].mxu0 %v517
      %v642 = vpop.f32.mrb[0].mxu0
      %v643 = vadd.f32 0.0, %v642
      %v644 = vpop.f32.mrb[0].mxu0
      %v645 = vpop.f32.mrb[0].mxu0
      %v646 = vadd.f32 0.0, %v645
      %v647 = vpop.f32.mrb[0].mxu0
      %648 = vmatprep.mubr.bf16.mxu0 0
      %649 = vmatmul.mubr.bf16.gmra.mrb[0].mxu0 %v520
      %v650 = vpop.f32.mrb[0].mxu0
      %v651 = vadd.f32 0.0, %v650
      %v652 = vpop.f32.mrb[0].mxu0
      %v653 = vpop.f32.mrb[0].mxu0
      %v654 = vadd.f32 0.0, %v653
      %v655 = vpop.f32.mrb[0].mxu0
      %656 = vmatprep.mubr.bf16.mxu0 0
      %657 = vmatmul.mubr.bf16.gmra.mrb[0].mxu0 %v523
      %v658 = vpop.f32.mrb[0].mxu0
      %v659 = vadd.f32 0.0, %v658
      %v660 = vpop.f32.mrb[0].mxu0
      %v661 = vpop.f32.mrb[0].mxu0
      %v662 = vadd.f32 0.0, %v661
      %v663 = vpop.f32.mrb[0].mxu0
      %664 = vmatprep.mubr.bf16.mxu0 0
      %665 = vmatmul.mubr.bf16.gmra.mrb[0].mxu0 %v526
      %v666 = vpop.f32.mrb[0].mxu0
      %v667 = vadd.f32 0.0, %v666
      %v668 = vpop.f32.mrb[0].mxu0
      %v669 = vpop.f32.mrb[0].mxu0
      %v670 = vadd.f32 0.0, %v669
      %v671 = vpop.f32.mrb[0].mxu0
      %672 = vmatprep.mubr.bf16.mxu0 0
      %673 = vmatmul.mubr.bf16.gmra.mrb[0].mxu0 %v529
      %v674 = vpop.f32.mrb[0].mxu0
      %v675 = vadd.f32 0.0, %v674
      %v676 = vpop.f32.mrb[0].mxu0
      %v677 = vpop.f32.mrb[0].mxu0
      %v678 = vadd.f32 0.0, %v677
      %v679 = vpop.f32.mrb[0].mxu0
      %680 = vmatprep.mubr.bf16.mxu0 0
      %681 = vmatmul.mubr.bf16.gmra.mrb[0].mxu0 %v532
      %v682 = vpop.f32.mrb[0].mxu0
      %v683 = vadd.f32 0.0, %v682
      %v684 = vpop.f32.mrb[0].mxu0
      %v685 = vpop.f32.mrb[0].mxu0
      %v686 = vadd.f32 0.0, %v685
      %v687 = vpop.f32.mrb[0].mxu0
      %688 = vmatprep.mubr.bf16.mxu0 0
      %689 = vmatmul.mubr.bf16.gmra.mrb[0].mxu0 %v535
      %v690 = vpop.f32.mrb[0].mxu0
      %v691 = vadd.f32 0.0, %v690
      %v692 = vpop.f32.mrb[0].mxu0
      %v693 = vpop.f32.mrb[0].mxu0
      %v694 = vadd.f32 0.0, %v693
      %v695 = vpop.f32.mrb[0].mxu0
      %696 = vmatprep.mubr.bf16.mxu0 0
      %697 = vmatmul.mubr.bf16.gmra.mrb[0].mxu0 %v538
      %v698 = vpop.f32.mrb[0].mxu0
      %v699 = vadd.f32 0.0, %v698
      %v700 = vpop.f32.mrb[0].mxu0
      %v701 = vpop.f32.mrb[0].mxu0
      %v702 = vadd.f32 0.0, %v701
      %v703 = vpop.f32.mrb[0].mxu0
      %704 = vdwg.mxu0
      %v705 = vadd.f32 %v327, %v579
      %v706 = vadd.f32 %v328, %v582
      %v707 = vadd.f32 %v329, %v587
      %v708 = vadd.f32 %v330, %v590
      %v709 = vadd.f32 %v331, %v595
      %v710 = vadd.f32 %v332, %v598
      %v711 = vadd.f32 %v333, %v603
      %v712 = vadd.f32 %v334, %v606
      %v713 = vadd.f32 %v335, %v611
      %v714 = vadd.f32 %v336, %v614
      %v715 = vadd.f32 %v337, %v619
      %v716 = vadd.f32 %v338, %v622
      %v717 = vadd.f32 %v339, %v627
      %v718 = vadd.f32 %v340, %v630
      %v719 = vadd.f32 %v341, %v635
      %v720 = vadd.f32 %v342, %v638
      %v721 = vadd.f32 %v343, %v643
      %v722 = vadd.f32 %v344, %v646
      %v723 = vadd.f32 %v345, %v651
      %v724 = vadd.f32 %v346, %v654
      %v725 = vadd.f32 %v347, %v659
      %v726 = vadd.f32 %v348, %v662
      %v727 = vadd.f32 %v349, %v667
      %v728 = vadd.f32 %v350, %v670
      %v729 = vadd.f32 %v351, %v675
      %v730 = vadd.f32 %v352, %v678
      %v731 = vadd.f32 %v353, %v683
      %v732 = vadd.f32 %v354, %v686
      %v733 = vadd.f32 %v355, %v691
      %v734 = vadd.f32 %v356, %v694
      %v735 = vadd.f32 %v357, %v699
      %v736 = vadd.f32 %v358, %v702
      %737 = vst [vmem:[#allocation2] sm:$0xff] %v705
      %738 = vst [vmem:[#allocation2 + $0x8] sm:$0xff] %v706
      %739 = vst [vmem:[#allocation2 + $0x10] sm:$0xff] %v707
      %740 = vst [vmem:[#allocation2 + $0x18] sm:$0xff] %v708
      %741 = vst [vmem:[#allocation2 + $0x20] sm:$0xff] %v709
      %742 = vst [vmem:[#allocation2 + $0x28] sm:$0xff] %v710
      %743 = vst [vmem:[#allocation2 + $0x30] sm:$0xff] %v711
      %744 = vst [vmem:[#allocation2 + $0x38] sm:$0xff] %v712
      %745 = vst [vmem:[#allocation2 + $0x40] sm:$0xff] %v713
      %746 = vst [vmem:[#allocation2 + $0x48] sm:$0xff] %v714
      %747 = vst [vmem:[#allocation2 + $0x50] sm:$0xff] %v715
      %748 = vst [vmem:[#allocation2 + $0x58] sm:$0xff] %v716
      %749 = vst [vmem:[#allocation2 + $0x60] sm:$0xff] %v717
      %750 = vst [vmem:[#allocation2 + $0x68] sm:$0xff] %v718
      %751 = vst [vmem:[#allocation2 + $0x70] sm:$0xff] %v719
      %752 = vst [vmem:[#allocation2 + $0x78] sm:$0xff] %v720
      %753 = vst [vmem:[#allocation2 + $0x80] sm:$0xff] %v721
      %754 = vst [vmem:[#allocation2 + $0x88] sm:$0xff] %v722
      %755 = vst [vmem:[#allocation2 + $0x90] sm:$0xff] %v723
      %756 = vst [vmem:[#allocation2 + $0x98] sm:$0xff] %v724
      %757 = vst [vmem:[#allocation2 + $0xa0] sm:$0xff] %v725
      %758 = vst [vmem:[#allocation2 + $0xa8] sm:$0xff] %v726
      %759 = vst [vmem:[#allocation2 + $0xb0] sm:$0xff] %v727
      %760 = vst [vmem:[#allocation2 + $0xb8] sm:$0xff] %v728
      %761 = vst [vmem:[#allocation2 + $0xc0] sm:$0xff] %v729
      %762 = vst [vmem:[#allocation2 + $0xc8] sm:$0xff] %v730
      %763 = vst [vmem:[#allocation2 + $0xd0] sm:$0xff] %v731
      %764 = vst [vmem:[#allocation2 + $0xd8] sm:$0xff] %v732
      %765 = vst [vmem:[#allocation2 + $0xe0] sm:$0xff] %v733
      %766 = vst [vmem:[#allocation2 + $0xe8] sm:$0xff] %v734
      %767 = vst [vmem:[#allocation2 + $0xf0] sm:$0xff] %v735
      %768 = vst [vmem:[#allocation2 + $0xf8] sm:$0xff] %v736
      // Predicated region
      $region37: #{cnn_block_forward.1} parent=31 // pred_check
        %p769 = pneg %p291
      $region38: #{cnn_block_forward.1} parent=31 // pred_check_branch
        %771 = sbr.rel (%p769) target = $region40
      $region39: #{cnn_block_forward.1} parent=31 // pred_region
        %v772 = vld [vmem:[#allocation2] sm:$0xff]
        %v773 = vld [vmem:[#allocation2 + $0x8] sm:$0xff]
        %v774 = vld [vmem:[#allocation2 + $0x10] sm:$0xff]
        %v775 = vld [vmem:[#allocation2 + $0x18] sm:$0xff]
        %v776 = vld [vmem:[#allocation2 + $0x20] sm:$0xff]
        %v777 = vld [vmem:[#allocation2 + $0x28] sm:$0xff]
        %v778 = vld [vmem:[#allocation2 + $0x30] sm:$0xff]
        %v779 = vld [vmem:[#allocation2 + $0x38] sm:$0xff]
        %v780 = vld [vmem:[#allocation2 + $0x40] sm:$0xff]
        %v781 = vld [vmem:[#allocation2 + $0x48] sm:$0xff]
        %v782 = vld [vmem:[#allocation2 + $0x50] sm:$0xff]
        %v783 = vld [vmem:[#allocation2 + $0x58] sm:$0xff]
        %v784 = vld [vmem:[#allocation2 + $0x60] sm:$0xff]
        %v785 = vld [vmem:[#allocation2 + $0x68] sm:$0xff]
        %v786 = vld [vmem:[#allocation2 + $0x70] sm:$0xff]
        %v787 = vld [vmem:[#allocation2 + $0x78] sm:$0xff]
        %v788 = vld [vmem:[#allocation2 + $0x80] sm:$0xff]
        %v789 = vld [vmem:[#allocation2 + $0x88] sm:$0xff]
        %v790 = vld [vmem:[#allocation2 + $0x90] sm:$0xff]
        %v791 = vld [vmem:[#allocation2 + $0x98] sm:$0xff]
        %v792 = vld [vmem:[#allocation2 + $0xa0] sm:$0xff]
        %v793 = vld [vmem:[#allocation2 + $0xa8] sm:$0xff]
        %v794 = vld [vmem:[#allocation2 + $0xb0] sm:$0xff]
        %v795 = vld [vmem:[#allocation2 + $0xb8] sm:$0xff]
        %v796 = vld [vmem:[#allocation2 + $0xc0] sm:$0xff]
        %v797 = vld [vmem:[#allocation2 + $0xc8] sm:$0xff]
        %v798 = vld [vmem:[#allocation2 + $0xd0] sm:$0xff]
        %v799 = vld [vmem:[#allocation2 + $0xd8] sm:$0xff]
        %v800 = vld [vmem:[#allocation2 + $0xe0] sm:$0xff]
        %v801 = vld [vmem:[#allocation2 + $0xe8] sm:$0xff]
        %v802 = vld [vmem:[#allocation2 + $0xf0] sm:$0xff]
        %v803 = vld [vmem:[#allocation2 + $0xf8] sm:$0xff]
        %v804 = vld [vmem:[%s276] sm:$0x1]
        %v806 = vlaneseq
        %v807 = vshrl.u32 %v806, 7
        %v808 = vsub.s32 0, %v807
        %v809 = vrot.slane %v804, %v808
        %v811 = vadd.f32 %v772, %v809
        %v812 = vadd.f32 %v773, %v809
        %v813 = vadd.f32 %v774, %v809
        %v814 = vadd.f32 %v775, %v809
        %v815 = vadd.f32 %v776, %v809
        %v816 = vadd.f32 %v777, %v809
        %v817 = vadd.f32 %v778, %v809
        %v818 = vadd.f32 %v779, %v809
        %v819 = vadd.f32 %v780, %v809
        %v820 = vadd.f32 %v781, %v809
        %v821 = vadd.f32 %v782, %v809
        %v822 = vadd.f32 %v783, %v809
        %v823 = vadd.f32 %v784, %v809
        %v824 = vadd.f32 %v785, %v809
        %v825 = vadd.f32 %v786, %v809
        %v826 = vadd.f32 %v787, %v809
        %v827 = vadd.f32 %v788, %v809
        %v828 = vadd.f32 %v789, %v809
        %v829 = vadd.f32 %v790, %v809
        %v830 = vadd.f32 %v791, %v809
        %v831 = vadd.f32 %v792, %v809
        %v832 = vadd.f32 %v793, %v809
        %v833 = vadd.f32 %v794, %v809
        %v834 = vadd.f32 %v795, %v809
        %v835 = vadd.f32 %v796, %v809
        %v836 = vadd.f32 %v797, %v809
        %v837 = vadd.f32 %v798, %v809
        %v838 = vadd.f32 %v799, %v809
        %v839 = vadd.f32 %v800, %v809
        %v840 = vadd.f32 %v801, %v809
        %v841 = vadd.f32 %v802, %v809
        %v842 = vadd.f32 %v803, %v809
        %v843 = vmul.f32 %v811, 0.1
        %v844 = vmul.f32 %v812, 0.1
        %v845 = vmul.f32 %v813, 0.1
        %v846 = vmul.f32 %v814, 0.1
        %v847 = vmul.f32 %v815, 0.1
        %v848 = vmul.f32 %v816, 0.1
        %v849 = vmul.f32 %v817, 0.1
        %v850 = vmul.f32 %v818, 0.1
        %v851 = vmul.f32 %v819, 0.1
        %v852 = vmul.f32 %v820, 0.1
        %v853 = vmul.f32 %v821, 0.1
        %v854 = vmul.f32 %v822, 0.1
        %v855 = vmul.f32 %v823, 0.1
        %v856 = vmul.f32 %v824, 0.1
        %v857 = vmul.f32 %v825, 0.1
        %v858 = vmul.f32 %v826, 0.1
        %v859 = vmul.f32 %v827, 0.1
        %v860 = vmul.f32 %v828, 0.1
        %v861 = vmul.f32 %v829, 0.1
        %v862 = vmul.f32 %v830, 0.1
        %v863 = vmul.f32 %v831, 0.1
        %v864 = vmul.f32 %v832, 0.1
        %v865 = vmul.f32 %v833, 0.1
        %v866 = vmul.f32 %v834, 0.1
        %v867 = vmul.f32 %v835, 0.1
        %v868 = vmul.f32 %v836, 0.1
        %v869 = vmul.f32 %v837, 0.1
        %v870 = vmul.f32 %v838, 0.1
        %v871 = vmul.f32 %v839, 0.1
        %v872 = vmul.f32 %v840, 0.1
        %v873 = vmul.f32 %v841, 0.1
        %v874 = vmul.f32 %v842, 0.1
        %v875 = vmax.f32 %v811, %v843
        %v876 = vmax.f32 %v812, %v844
        %v877 = vmax.f32 %v813, %v845
        %v878 = vmax.f32 %v814, %v846
        %v879 = vmax.f32 %v815, %v847
        %v880 = vmax.f32 %v816, %v848
        %v881 = vmax.f32 %v817, %v849
        %v882 = vmax.f32 %v818, %v850
        %v883 = vmax.f32 %v819, %v851
        %v884 = vmax.f32 %v820, %v852
        %v885 = vmax.f32 %v821, %v853
        %v886 = vmax.f32 %v822, %v854
        %v887 = vmax.f32 %v823, %v855
        %v888 = vmax.f32 %v824, %v856
        %v889 = vmax.f32 %v825, %v857
        %v890 = vmax.f32 %v826, %v858
        %v891 = vmax.f32 %v827, %v859
        %v892 = vmax.f32 %v828, %v860
        %v893 = vmax.f32 %v829, %v861
        %v894 = vmax.f32 %v830, %v862
        %v895 = vmax.f32 %v831, %v863
        %v896 = vmax.f32 %v832, %v864
        %v897 = vmax.f32 %v833, %v865
        %v898 = vmax.f32 %v834, %v866
        %v899 = vmax.f32 %v835, %v867
        %v900 = vmax.f32 %v836, %v868
        %v901 = vmax.f32 %v837, %v869
        %v902 = vmax.f32 %v838, %v870
        %v903 = vmax.f32 %v839, %v871
        %v904 = vmax.f32 %v840, %v872
        %v905 = vmax.f32 %v841, %v873
        %v906 = vmax.f32 %v842, %v874
        %v907 = vpack.c.bf16 %v876, %v875
        %v908 = vpack.c.bf16 %v878, %v877
        %v909 = vpack.c.bf16 %v880, %v879
        %v910 = vpack.c.bf16 %v882, %v881
        %v911 = vpack.c.bf16 %v884, %v883
        %v912 = vpack.c.bf16 %v886, %v885
        %v913 = vpack.c.bf16 %v888, %v887
        %v914 = vpack.c.bf16 %v890, %v889
        %v915 = vpack.c.bf16 %v892, %v891
        %v916 = vpack.c.bf16 %v894, %v893
        %v917 = vpack.c.bf16 %v896, %v895
        %v918 = vpack.c.bf16 %v898, %v897
        %v919 = vpack.c.bf16 %v900, %v899
        %v920 = vpack.c.bf16 %v902, %v901
        %v921 = vpack.c.bf16 %v904, %v903
        %v922 = vpack.c.bf16 %v906, %v905
        %v939 = vunpack.c.l.b16 %v907
        %v940 = vunpack.c.h.b16 %v907
        %v941 = vunpack.c.l.b16 %v908
        %v942 = vunpack.c.h.b16 %v908
        %v943 = vunpack.c.l.b16 %v909
        %v944 = vunpack.c.h.b16 %v909
        %v945 = vunpack.c.l.b16 %v910
        %v946 = vunpack.c.h.b16 %v910
        %v947 = vunpack.c.l.b16 %v911
        %v948 = vunpack.c.h.b16 %v911
        %v949 = vunpack.c.l.b16 %v912
        %v950 = vunpack.c.h.b16 %v912
        %v951 = vunpack.c.l.b16 %v913
        %v952 = vunpack.c.h.b16 %v913
        %v953 = vunpack.c.l.b16 %v914
        %v954 = vunpack.c.h.b16 %v914
        %v955 = vunpack.c.l.b16 %v915
        %v956 = vunpack.c.h.b16 %v915
        %v957 = vunpack.c.l.b16 %v916
        %v958 = vunpack.c.h.b16 %v916
        %v959 = vunpack.c.l.b16 %v917
        %v960 = vunpack.c.h.b16 %v917
        %v961 = vunpack.c.l.b16 %v918
        %v962 = vunpack.c.h.b16 %v918
        %v963 = vunpack.c.l.b16 %v919
        %v964 = vunpack.c.h.b16 %v919
        %v965 = vunpack.c.l.b16 %v920
        %v966 = vunpack.c.h.b16 %v920
        %v967 = vunpack.c.l.b16 %v921
        %v968 = vunpack.c.h.b16 %v921
        %v969 = vunpack.c.l.b16 %v922
        %v970 = vunpack.c.h.b16 %v922
        %v971 = vpack.c.b16 %v939, %v939
        %v972 = vpack.c.b16 %v940, %v940
        %v973 = vpack.c.b16 %v941, %v941
        %v974 = vpack.c.b16 %v942, %v942
        %v975 = vpack.c.b16 %v943, %v943
        %v976 = vpack.c.b16 %v944, %v944
        %v977 = vpack.c.b16 %v945, %v945
        %v978 = vpack.c.b16 %v946, %v946
        %v979 = vpack.c.b16 %v947, %v947
        %v980 = vpack.c.b16 %v948, %v948
        %v981 = vpack.c.b16 %v949, %v949
        %v982 = vpack.c.b16 %v950, %v950
        %v983 = vpack.c.b16 %v951, %v951
        %v984 = vpack.c.b16 %v952, %v952
        %v985 = vpack.c.b16 %v953, %v953
        %v986 = vpack.c.b16 %v954, %v954
        %v987 = vpack.c.b16 %v955, %v955
        %v988 = vpack.c.b16 %v956, %v956
        %v989 = vpack.c.b16 %v957, %v957
        %v990 = vpack.c.b16 %v958, %v958
        %v991 = vpack.c.b16 %v959, %v959
        %v992 = vpack.c.b16 %v960, %v960
        %v993 = vpack.c.b16 %v961, %v961
        %v994 = vpack.c.b16 %v962, %v962
        %v995 = vpack.c.b16 %v963, %v963
        %v996 = vpack.c.b16 %v964, %v964
        %v997 = vpack.c.b16 %v965, %v965
        %v998 = vpack.c.b16 %v966, %v966
        %v999 = vpack.c.b16 %v967, %v967
        %v1000 = vpack.c.b16 %v968, %v968
        %v1001 = vpack.c.b16 %v969, %v969
        %v1002 = vpack.c.b16 %v970, %v970
        %1035 = vst [vmem:[%s288] sm:$0xf] %v971
        %1036 = vst [vmem:[%s288 + $0x4] sm:$0xf] %v972
        %1037 = vst [vmem:[%s288 + $0x8] sm:$0xf] %v973
        %1038 = vst [vmem:[%s288 + $0xc] sm:$0xf] %v974
        %1039 = vst [vmem:[%s288 + $0x10] sm:$0xf] %v975
        %1040 = vst [vmem:[%s288 + $0x14] sm:$0xf] %v976
        %1041 = vst [vmem:[%s288 + $0x18] sm:$0xf] %v977
        %1042 = vst [vmem:[%s288 + $0x1c] sm:$0xf] %v978
        %1043 = vst [vmem:[%s288 + $0x20] sm:$0xf] %v979
        %1044 = vst [vmem:[%s288 + $0x24] sm:$0xf] %v980
        %1045 = vst [vmem:[%s288 + $0x28] sm:$0xf] %v981
        %1046 = vst [vmem:[%s288 + $0x2c] sm:$0xf] %v982
        %1047 = vst [vmem:[%s288 + $0x30] sm:$0xf] %v983
        %1048 = vst [vmem:[%s288 + $0x34] sm:$0xf] %v984
        %1049 = vst [vmem:[%s288 + $0x38] sm:$0xf] %v985
        %1050 = vst [vmem:[%s288 + $0x3c] sm:$0xf] %v986
        %1051 = vst [vmem:[%s288 + $0x40] sm:$0xf] %v987
        %1052 = vst [vmem:[%s288 + $0x44] sm:$0xf] %v988
        %1053 = vst [vmem:[%s288 + $0x48] sm:$0xf] %v989
        %1054 = vst [vmem:[%s288 + $0x4c] sm:$0xf] %v990
        %1055 = vst [vmem:[%s288 + $0x50] sm:$0xf] %v991
        %1056 = vst [vmem:[%s288 + $0x54] sm:$0xf] %v992
        %1057 = vst [vmem:[%s288 + $0x58] sm:$0xf] %v993
        %1058 = vst [vmem:[%s288 + $0x5c] sm:$0xf] %v994
        %1059 = vst [vmem:[%s288 + $0x60] sm:$0xf] %v995
        %1060 = vst [vmem:[%s288 + $0x64] sm:$0xf] %v996
        %1061 = vst [vmem:[%s288 + $0x68] sm:$0xf] %v997
        %1062 = vst [vmem:[%s288 + $0x6c] sm:$0xf] %v998
        %1063 = vst [vmem:[%s288 + $0x70] sm:$0xf] %v999
        %1064 = vst [vmem:[%s288 + $0x74] sm:$0xf] %v1000
        %1065 = vst [vmem:[%s288 + $0x78] sm:$0xf] %v1001
        %1066 = vst [vmem:[%s288 + $0x7c] sm:$0xf] %v1002
      $region40: #{cnn_block_forward.1} parent=31 // pred_fallthru
        _
      %s1067 = smul.u32 32, %s21
      %p1068 = scmp.lt.s32.totalorder %s20, 1
      %s1069 = scalar_select %p1068, %s20, 1
      %p1070 = scmp.lt.s32.totalorder %s1067, 31
      %s1071 = scalar_select %p1070, %s1067, 31
      %p1072 = scmp.lt.s32.totalorder %s22, 0
      %s1073 = scalar_select %p1072, %s22, 0
      %s1074 = sadd.s32 %s1073, %s1071
      %s1075 = smul.addr %s1069, 32
      %s1076 = sadd.s32 %s1074, %s1075
      %s1077 = smul.addr %s1076, 4
      %s1078 = scalar_lea.vmem %s3, %s1077
      // Predicated region
      $region41: #{cnn_block_forward.1} parent=31 // pred_check
        %p1079 = pneg %p146
      $region42: #{cnn_block_forward.1} parent=31 // pred_check_branch
        %1081 = sbr.rel (%p1079) target = $region44
      $region43: #{cnn_block_forward.1} parent=31 // pred_region
        %s1082 = smul.u32 32, %s21
      $region44: #{cnn_block_forward.1} parent=31 // pred_fallthru
        _
    $region32: #{cnn_block_forward.1} parent=5 // pred_fallthru
      _
    %p1083 = scmp.le.s32.totalorder 2, %s9
    // Predicated region
    $region45: #{cnn_block_forward.1} parent=5 // pred_check
      %p1084 = pneg %p1083
    $region46: #{cnn_block_forward.1} parent=5 // pred_check_branch
      %1086 = sbr.rel (%p1084) target = $region48
    $region47: #{cnn_block_forward.1} parent=5 // pred_region
      %s1087 = ssub.s32 %s9, 2
      // Predicated region
      $region49: #{cnn_block_forward.1} parent=47 // pred_check
        %p1088 = pneg %p152
      $region50: #{cnn_block_forward.1} parent=47 // pred_check_branch
        %1090 = sbr.rel (%p1088) target = $region52
      $region51: #{cnn_block_forward.1} parent=47 // pred_region
        %s1091 = smul.u32 32, %s25
        %p1092 = scmp.lt.s32.totalorder %s24, 1
        %s1093 = scalar_select %p1092, %s24, 1
        %p1094 = scmp.lt.s32.totalorder %s1091, 31
        %s1095 = scalar_select %p1094, %s1091, 31
        %p1096 = scmp.lt.s32.totalorder %s26, 0
        %s1097 = scalar_select %p1096, %s26, 0
        %s1098 = sadd.s32 %s1097, %s1095
        %s1099 = smul.addr %s1093, 32
        %s1100 = sadd.s32 %s1098, %s1099
        %s1101 = smul.addr %s1100, 4
        %s1102 = scalar_lea.vmem %s3, %s1101
      $region52: #{cnn_block_forward.1} parent=47 // pred_fallthru
        _
    $region48: #{cnn_block_forward.1} parent=5 // pred_fallthru
      _
  $region6: #{cnn_block_forward.1} parent=0 // loop_footer
    %s13 = sadd.s32 1, %s9
  $region7: #{cnn_block_forward.1} parent=0 // loop_footer_branch
    %8 = sbr.rel target = $region3
  $region8: #{cnn_block_forward.1} parent=0 // loop_exit
    _

</llo_original>
